<compile_context>
chip_gen: v6e
topology: v6e:2x2x1
jax: 0.10.0
libtpu: 0.0.40
codegen_flags: <defaults>
</compile_context>

<pallas_src>
import functools

import jax
import jax.numpy as jnp
from jax import lax
from jax.experimental import pallas as pl
from jax.experimental.pallas import tpu as pltpu


_LANES = 128
_SUBLANES = 8


def _round_up(x, m):
    return (x + m - 1) // m * m


def _bce_dice_partials_kernel(pred_ref, tgt_ref, out_ref, *,
                              rows, block_rows, chunk_rows,
                              needs_mask, hard_targets):
    """Grid: (B, 2, tiles_per_half).

    pred_ref / tgt_ref: (1, block_rows, 128) block of the (B, rows, 128) inputs.
    out_ref:            (1, 1, 4, 8, 128) resident per-(batch, half) accumulator
                        of lane/sublane partial sums:
                        row 0: bce, row 1: pred*target, row 2: pred, row 3: target.
    """
    k = pl.program_id(2)

    @pl.when(k == 0)
    def _():
        out_ref[...] = jnp.zeros_like(out_ref)

    # Unclamped global tile index (used only for tail masking).
    g = pl.program_id(1) * pl.num_programs(2) + k
    tile_row0 = g * block_rows

    n_chunks = block_rows // chunk_rows

    def body(c, carry):
        acc_bce, acc_pt, acc_p, acc_t = carry
        off = pl.multiple_of(c * chunk_rows, 8)
        p = pred_ref[0, pl.ds(off, chunk_rows), :].astype(jnp.float32)
        t = tgt_ref[0, pl.ds(off, chunk_rows), :].astype(jnp.float32)

        if needs_mask:
            # Rows at/after `rows` (ragged tile tail or fully-extra tile) are
            # zeroed; bce(p=0, t=0) == 0 with the -100 log clamp, so they
            # contribute nothing to any sum.
            valid = rows - (tile_row0 + c * chunk_rows)
            row_id = lax.broadcasted_iota(jnp.int32, (chunk_rows, 1), 0)
            m = row_id < valid
            p = jnp.where(m, p, 0.0)
            t = jnp.where(m, t, 0.0)

        if hard_targets:
            # Valid only for t in {0, 1}: one log per element.
            q = 1.0 - p - t + 2.0 * p * t
            bce = -jnp.maximum(jnp.log(q), -100.0)
        else:
            # Exact torch.nn.BCELoss (soft-label capable), log clamped at -100.
            log_p = jnp.maximum(jnp.log(p), -100.0)
            log_1p = jnp.maximum(jnp.log(1.0 - p), -100.0)
            bce = -(log_1p + t * (log_p - log_1p))

        def fold(x):
            # (chunk_rows, 128) -> (8, 128): sum whole vregs elementwise (VPU only).
            return jnp.sum(
                x.reshape(chunk_rows // _SUBLANES, _SUBLANES, _LANES), axis=0)

        return (acc_bce + fold(bce), acc_pt + fold(p * t),
                acc_p + fold(p), acc_t + fold(t))

    zero = jnp.zeros((_SUBLANES, _LANES), jnp.float32)
    acc_bce, acc_pt, acc_p, acc_t = lax.fori_loop(
        0, n_chunks, body, (zero, zero, zero, zero),
        unroll=min(4, n_chunks))

    # One small read-modify-write of the resident accumulator per grid step.
    out_ref[0, 0, 0] += acc_bce
    out_ref[0, 0, 1] += acc_pt
    out_ref[0, 0, 2] += acc_p
    out_ref[0, 0, 3] += acc_t


def bce_dice_loss(pred, target, *, assume_hard_targets=False):
    """pred, target: (B, C, H, W); pred values in (0, 1) (as for nn.BCELoss).

    Accepts f32 or bf16 inputs (bf16 halves HBM traffic; accumulation is f32
    in-kernel).  `assume_hard_targets=True` enables a single-log fast path that
    is only valid for targets in {0, 1}.
    """
    assert pred.shape == target.shape
    b = pred.shape[0]
    n = 1
    for d in pred.shape[1:]:
        n *= d

    # Per-generation block budget: bigger blocks on 128 MiB-VMEM chips
    # (v5e / v6e), smaller on 64 MiB-VMEM v7x.
    try:
        vmem_cap = pltpu.get_tpu_info().vmem_capacity_bytes
    except Exception:  # pragma: no cover - conservative fallback
        vmem_cap = 64 * 1024 * 1024
    if vmem_cap >= 128 * 1024 * 1024:
        max_rows = 8192                      # 4 MiB f32 per input block
        vmem_limit = 64 * 1024 * 1024
    else:
        max_rows = 4096                      # 2 MiB f32 per input block
        vmem_limit = 32 * 1024 * 1024

    pred_flat = pred.reshape(b, n)
    tgt_flat = target.reshape(b, n)

    # Common case (n % 1024 == 0): zero-copy, layout-preserving reshape only.
    n_padded = _round_up(n, _SUBLANES * _LANES)
    if n_padded != n:
        # TODO(synk): the ragged (n % 1024 != 0) tail could also be lane-masked
        # in-kernel to avoid this copy; zero padding is exact for every sum.
        pad = ((0, 0), (0, n_padded - n))
        pred_flat = jnp.pad(pred_flat, pad)
        tgt_flat = jnp.pad(tgt_flat, pad)

    rows = n_padded // _LANES                # multiple of 8

    if rows <= 64:
        block_rows = rows                    # full-dim block for tiny inputs
    else:
        # At least two real tiles (balances the 2 "half" parallel workers).
        block_rows = min(max_rows, _round_up(pl.cdiv(rows, 2), 64))
    chunk_rows = min(64, block_rows)
    num_tiles = pl.cdiv(rows, block_rows)
    tiles_per_half = pl.cdiv(num_tiles, 2)
    needs_mask = (2 * tiles_per_half * block_rows) != rows

    pred3 = pred_flat.reshape(b, rows, _LANES)
    tgt3 = tgt_flat.reshape(b, rows, _LANES)

    if 2 * tiles_per_half == num_tiles:
        def in_map(bi, hi, ki):
            return (bi, hi * tiles_per_half + ki, 0)
    else:
        def in_map(bi, hi, ki):
            # Clamp fully-out-of-range tile indices; their data is masked to 0.
            return (bi, jnp.minimum(hi * tiles_per_half + ki, num_tiles - 1), 0)

    kernel = functools.partial(
        _bce_dice_partials_kernel,
        rows=rows, block_rows=block_rows, chunk_rows=chunk_rows,
        needs_mask=needs_mask, hard_targets=assume_hard_targets)

    partials = pl.pallas_call(
        kernel,
        out_shape=jax.ShapeDtypeStruct((b, 2, 4, _SUBLANES, _LANES), jnp.float32),
        grid_spec=pltpu.PrefetchScalarGridSpec(
            num_scalar_prefetch=0,
            grid=(b, 2, tiles_per_half),
            in_specs=[
                pl.BlockSpec((1, block_rows, _LANES), in_map),
                pl.BlockSpec((1, block_rows, _LANES), in_map),
            ],
            out_specs=pl.BlockSpec((1, 1, 4, _SUBLANES, _LANES),
                                   lambda bi, hi, ki: (bi, hi, 0, 0, 0)),
        ),
        compiler_params=pltpu.CompilerParams(
            dimension_semantics=("parallel", "parallel", "arbitrary"),
            vmem_limit_bytes=vmem_limit,
        ),
    )(pred3, tgt3)

    # Final cross-lane reduction + BCE/Dice combine in plain JAX (tiny tensors).
    sums = jnp.sum(partials, axis=(1, 3, 4))         # (B, 4)
    bce_mean = jnp.sum(sums[:, 0]) / (b * n)         # mean over all B*N elements
    smooth = 1.0
    dice = (2.0 * sums[:, 1] + smooth) / (sums[:, 2] + sums[:, 3] + smooth)
    dice_loss = 1.0 - jnp.sum(dice) / b
    return dice_loss + bce_mean


def _reference(pred, target):
    b = pred.shape[0]
    p = pred.reshape(b, -1).astype(jnp.float32)
    t = target.reshape(b, -1).astype(jnp.float32)
    bce = -(t * jnp.maximum(jnp.log(p), -100.0)
            + (1.0 - t) * jnp.maximum(jnp.log(1.0 - p), -100.0))
    bce_mean = jnp.mean(bce)
    smooth = 1.0
    inter = jnp.sum(p * t, axis=1)
    dice = (2.0 * inter + smooth) / (jnp.sum(p, axis=1) + jnp.sum(t, axis=1) + smooth)
    dice_loss = 1.0 - jnp.sum(dice) / b
    return dice_loss + bce_mean


if __name__ == "__main__":
    key = jax.random.PRNGKey(0)

    # (B, C, H, W): exercise the single-tile, ragged-tile, and multi-chunk paths.
    test_shapes = [
        (2, 4, 16, 16),    # n = 1024 : rows = 8, tiny / masked-extra-half path
        (2, 4, 64, 40),    # n = 10240: rows = 80, ragged last tile (masked)
        (1, 8, 64, 64),    # n = 32768: rows = 256, exact split, multi-chunk loop
    ]

    ok = True
    for shape in test_shapes:
        k1, k2, key = jax.random.split(key, 3)
        pred = jax.nn.sigmoid(jax.random.normal(k1, shape, dtype=jnp.float32))
        target = (jax.random.uniform(k2, shape) > 0.5).astype(jnp.float32)

        loss = jax.block_until_ready(bce_dice_loss(pred, target))
        ref = jax.block_until_ready(_reference(pred, target))
        if not jnp.allclose(loss, ref, rtol=1e-5, atol=1e-5):
            ok = False
            print("MISMATCH", shape, loss, ref)

    assert ok
    print("KERNEL_OK")
</pallas_src>

<mosaic_0001>
module attributes {stable_mosaic.version = 11 : i64} {
  func.func @_bce_dice_partials_kernel(%arg0: i32, %arg1: i32, %arg2: i32, %arg3: memref<1x8x128xf32, #tpu.memory_space<vmem>>, %arg4: memref<1x8x128xf32, #tpu.memory_space<vmem>>, %arg5: memref<1x1x4x8x128xf32, #tpu.memory_space<vmem>>) attributes {dimension_semantics = [#tpu.dimension_semantics<parallel>, #tpu.dimension_semantics<parallel>, #tpu.dimension_semantics<arbitrary>], iteration_bounds = array<i64: 2, 2, 1>, scalar_prefetch = 0 : i64, scratch_operands = 0 : i64, tpu.core_type = #tpu.core_type<tc>, window_params = [{transform_indices = @transform_0, window_bounds = array<i64: 1, 8, 128>}, {transform_indices = @transform_1, window_bounds = array<i64: 1, 8, 128>}, {transform_indices = @transform_2, window_bounds = array<i64: 1, 1, 4, 8, 128>}]} {
    %c0_i32 = arith.constant 0 : i32
    %0 = arith.cmpi eq, %arg2, %c0_i32 : i32
    %1 = arith.extui %0 : i1 to i32
    %c0_i32_0 = arith.constant 0 : i32
    %2 = arith.cmpi ne, %1, %c0_i32_0 : i32
    scf.if %2 {
      %cst_56 = arith.constant 0.000000e+00 : f32
      %79 = vector.broadcast %cst_56 : f32 to vector<1x1x4x8x128xf32>
      %c0_57 = arith.constant 0 : index
      %c0_58 = arith.constant 0 : index
      %c0_59 = arith.constant 0 : index
      %c0_60 = arith.constant 0 : index
      %c0_61 = arith.constant 0 : index
      %80 = vector.load %arg5[%c0_57, %c0_58, %c0_59, %c0_60, %c0_61] : memref<1x1x4x8x128xf32, #tpu.memory_space<vmem>>, vector<1x1x4x8x128xf32>
      tpu.vector_store %arg5[%c0_57, %c0_58, %c0_59, %c0_60, %c0_61], %79 {strides = array<i32>} : memref<1x1x4x8x128xf32, #tpu.memory_space<vmem>>, vector<1x1x4x8x128xf32>,
    } else {
    }
    %c1_i32 = arith.constant 1 : i32
    %3 = arith.muli %arg1, %c1_i32 : i32
    %4 = arith.addi %3, %arg2 : i32
    %c8_i32 = arith.constant 8 : i32
    %5 = arith.muli %4, %c8_i32 : i32
    %cst = arith.constant 0.000000e+00 : f32
    %6 = vector.broadcast %cst : f32 to vector<8x128xf32>
    %c0_i32_1 = arith.constant 0 : i32
    %c8_i32_2 = arith.constant 8 : i32
    %7 = arith.muli %c0_i32_1, %c8_i32_2 : i32
    %8 = tpu.assume_multiple %7, 8 : i32
    %c0 = arith.constant 0 : index
    %9 = arith.index_cast %8 : i32 to index
    %c0_3 = arith.constant 0 : index
    %10 = vector.load %arg3[%c0, %9, %c0_3] : memref<1x8x128xf32, #tpu.memory_space<vmem>>, vector<1x8x128xf32>
    %11 = vector.shape_cast %10 : vector<1x8x128xf32> to vector<8x128xf32>
    %c0_4 = arith.constant 0 : index
    %12 = arith.index_cast %8 : i32 to index
    %c0_5 = arith.constant 0 : index
    %13 = vector.load %arg4[%c0_4, %12, %c0_5] : memref<1x8x128xf32, #tpu.memory_space<vmem>>, vector<1x8x128xf32>
    %14 = vector.shape_cast %13 : vector<1x8x128xf32> to vector<8x128xf32>
    %c8_i32_6 = arith.constant 8 : i32
    %15 = arith.muli %c0_i32_1, %c8_i32_6 : i32
    %16 = arith.addi %5, %15 : i32
    %c8_i32_7 = arith.constant 8 : i32
    %17 = arith.subi %c8_i32_7, %16 : i32
    %18 = tpu.iota {dimensions = array<i32: 0>} : vector<8x1xi32>
    %19 = vector.broadcast %17 : i32 to vector<8x1xi32>
    %20 = arith.cmpi slt, %18, %19 : vector<8x1xi32>
    %cst_8 = arith.constant 0.000000e+00 : f32
    %21 = vector.shape_cast %20 : vector<8x1xi1> to vector<8x1xi1>
    %22 = vector.broadcast %21 : vector<8x1xi1> to vector<8x128xi1>
    %23 = vector.broadcast %cst_8 : f32 to vector<8x128xf32>
    %24 = arith.select %22, %11, %23 : vector<8x128xi1>, vector<8x128xf32>
    %cst_9 = arith.constant 0.000000e+00 : f32
    %25 = vector.shape_cast %20 : vector<8x1xi1> to vector<8x1xi1>
    %26 = vector.broadcast %25 : vector<8x1xi1> to vector<8x128xi1>
    %27 = vector.broadcast %cst_9 : f32 to vector<8x128xf32>
    %28 = arith.select %26, %14, %27 : vector<8x128xi1>, vector<8x128xf32>
    %29 = math.log %24 : vector<8x128xf32>
    %cst_10 = arith.constant -1.000000e+02 : f32
    %30 = vector.broadcast %cst_10 : f32 to vector<8x128xf32>
    %31 = arith.maximumf %29, %30 : vector<8x128xf32>
    %cst_11 = arith.constant 1.000000e+00 : f32
    %32 = vector.broadcast %cst_11 : f32 to vector<8x128xf32>
    %33 = arith.subf %32, %24 : vector<8x128xf32>
    %34 = math.log %33 : vector<8x128xf32>
    %cst_12 = arith.constant -1.000000e+02 : f32
    %35 = vector.broadcast %cst_12 : f32 to vector<8x128xf32>
    %36 = arith.maximumf %34, %35 : vector<8x128xf32>
    %37 = arith.subf %31, %36 : vector<8x128xf32>
    %38 = arith.mulf %28, %37 : vector<8x128xf32>
    %39 = arith.addf %36, %38 : vector<8x128xf32>
    %cst_13 = arith.constant 0.000000e+00 : f32
    %40 = vector.broadcast %cst_13 : f32 to vector<8x128xf32>
    %41 = arith.subf %40, %39 : vector<8x128xf32>
    %42 = vector.shape_cast %41 : vector<8x128xf32> to vector<1x8x128xf32>
    %cst_14 = arith.constant dense<0.000000e+00> : vector<8x128xf32>
    %43 = vector.multi_reduction <add>, %42, %cst_14 [0] : vector<1x8x128xf32> to vector<8x128xf32>
    %44 = arith.addf %6, %43 : vector<8x128xf32>
    %45 = arith.mulf %24, %28 : vector<8x128xf32>
    %46 = vector.shape_cast %45 : vector<8x128xf32> to vector<1x8x128xf32>
    %cst_15 = arith.constant dense<0.000000e+00> : vector<8x128xf32>
    %47 = vector.multi_reduction <add>, %46, %cst_15 [0] : vector<1x8x128xf32> to vector<8x128xf32>
    %48 = arith.addf %6, %47 : vector<8x128xf32>
    %49 = vector.shape_cast %24 : vector<8x128xf32> to vector<1x8x128xf32>
    %cst_16 = arith.constant dense<0.000000e+00> : vector<8x128xf32>
    %50 = vector.multi_reduction <add>, %49, %cst_16 [0] : vector<1x8x128xf32> to vector<8x128xf32>
    %51 = arith.addf %6, %50 : vector<8x128xf32>
    %52 = vector.shape_cast %28 : vector<8x128xf32> to vector<1x8x128xf32>
    %cst_17 = arith.constant dense<0.000000e+00> : vector<8x128xf32>
    %53 = vector.multi_reduction <add>, %52, %cst_17 [0] : vector<1x8x128xf32> to vector<8x128xf32>
    %54 = arith.addf %6, %53 : vector<8x128xf32>
    %c1_i32_18 = arith.constant 1 : i32
    %c0_19 = arith.constant 0 : index
    %c0_20 = arith.constant 0 : index
    %c0_21 = arith.constant 0 : index
    %c0_22 = arith.constant 0 : index
    %c0_23 = arith.constant 0 : index
    %55 = vector.load %arg5[%c0_19, %c0_20, %c0_21, %c0_22, %c0_23] : memref<1x1x4x8x128xf32, #tpu.memory_space<vmem>>, vector<1x1x1x8x128xf32>
    %56 = vector.shape_cast %55 : vector<1x1x1x8x128xf32> to vector<8x128xf32>
    %57 = arith.addf %56, %44 : vector<8x128xf32>
    %c0_24 = arith.constant 0 : index
    %c0_25 = arith.constant 0 : index
    %c0_26 = arith.constant 0 : index
    %c0_27 = arith.constant 0 : index
    %c0_28 = arith.constant 0 : index
    %58 = vector.load %arg5[%c0_24, %c0_25, %c0_26, %c0_27, %c0_28] : memref<1x1x4x8x128xf32, #tpu.memory_space<vmem>>, vector<1x1x1x8x128xf32>
    %59 = vector.shape_cast %58 : vector<1x1x1x8x128xf32> to vector<8x128xf32>
    %60 = vector.shape_cast %57 : vector<8x128xf32> to vector<1x1x1x8x128xf32>
    tpu.vector_store %arg5[%c0_24, %c0_25, %c0_26, %c0_27, %c0_28], %60 {strides = array<i32>} : memref<1x1x4x8x128xf32, #tpu.memory_space<vmem>>, vector<1x1x1x8x128xf32>,
    %c0_29 = arith.constant 0 : index
    %c0_30 = arith.constant 0 : index
    %c1 = arith.constant 1 : index
    %c0_31 = arith.constant 0 : index
    %c0_32 = arith.constant 0 : index
    %61 = vector.load %arg5[%c0_29, %c0_30, %c1, %c0_31, %c0_32] : memref<1x1x4x8x128xf32, #tpu.memory_space<vmem>>, vector<1x1x1x8x128xf32>
    %62 = vector.shape_cast %61 : vector<1x1x1x8x128xf32> to vector<8x128xf32>
    %63 = arith.addf %62, %48 : vector<8x128xf32>
    %c0_33 = arith.constant 0 : index
    %c0_34 = arith.constant 0 : index
    %c1_35 = arith.constant 1 : index
    %c0_36 = arith.constant 0 : index
    %c0_37 = arith.constant 0 : index
    %64 = vector.load %arg5[%c0_33, %c0_34, %c1_35, %c0_36, %c0_37] : memref<1x1x4x8x128xf32, #tpu.memory_space<vmem>>, vector<1x1x1x8x128xf32>
    %65 = vector.shape_cast %64 : vector<1x1x1x8x128xf32> to vector<8x128xf32>
    %66 = vector.shape_cast %63 : vector<8x128xf32> to vector<1x1x1x8x128xf32>
    tpu.vector_store %arg5[%c0_33, %c0_34, %c1_35, %c0_36, %c0_37], %66 {strides = array<i32>} : memref<1x1x4x8x128xf32, #tpu.memory_space<vmem>>, vector<1x1x1x8x128xf32>,
    %c0_38 = arith.constant 0 : index
    %c0_39 = arith.constant 0 : index
    %c2 = arith.constant 2 : index
    %c0_40 = arith.constant 0 : index
    %c0_41 = arith.constant 0 : index
    %67 = vector.load %arg5[%c0_38, %c0_39, %c2, %c0_40, %c0_41] : memref<1x1x4x8x128xf32, #tpu.memory_space<vmem>>, vector<1x1x1x8x128xf32>
    %68 = vector.shape_cast %67 : vector<1x1x1x8x128xf32> to vector<8x128xf32>
    %69 = arith.addf %68, %51 : vector<8x128xf32>
    %c0_42 = arith.constant 0 : index
    %c0_43 = arith.constant 0 : index
    %c2_44 = arith.constant 2 : index
    %c0_45 = arith.constant 0 : index
    %c0_46 = arith.constant 0 : index
    %70 = vector.load %arg5[%c0_42, %c0_43, %c2_44, %c0_45, %c0_46] : memref<1x1x4x8x128xf32, #tpu.memory_space<vmem>>, vector<1x1x1x8x128xf32>
    %71 = vector.shape_cast %70 : vector<1x1x1x8x128xf32> to vector<8x128xf32>
    %72 = vector.shape_cast %69 : vector<8x128xf32> to vector<1x1x1x8x128xf32>
    tpu.vector_store %arg5[%c0_42, %c0_43, %c2_44, %c0_45, %c0_46], %72 {strides = array<i32>} : memref<1x1x4x8x128xf32, #tpu.memory_space<vmem>>, vector<1x1x1x8x128xf32>,
    %c0_47 = arith.constant 0 : index
    %c0_48 = arith.constant 0 : index
    %c3 = arith.constant 3 : index
    %c0_49 = arith.constant 0 : index
    %c0_50 = arith.constant 0 : index
    %73 = vector.load %arg5[%c0_47, %c0_48, %c3, %c0_49, %c0_50] : memref<1x1x4x8x128xf32, #tpu.memory_space<vmem>>, vector<1x1x1x8x128xf32>
    %74 = vector.shape_cast %73 : vector<1x1x1x8x128xf32> to vector<8x128xf32>
    %75 = arith.addf %74, %54 : vector<8x128xf32>
    %c0_51 = arith.constant 0 : index
    %c0_52 = arith.constant 0 : index
    %c3_53 = arith.constant 3 : index
    %c0_54 = arith.constant 0 : index
    %c0_55 = arith.constant 0 : index
    %76 = vector.load %arg5[%c0_51, %c0_52, %c3_53, %c0_54, %c0_55] : memref<1x1x4x8x128xf32, #tpu.memory_space<vmem>>, vector<1x1x1x8x128xf32>
    %77 = vector.shape_cast %76 : vector<1x1x1x8x128xf32> to vector<8x128xf32>
    %78 = vector.shape_cast %75 : vector<8x128xf32> to vector<1x1x1x8x128xf32>
    tpu.vector_store %arg5[%c0_51, %c0_52, %c3_53, %c0_54, %c0_55], %78 {strides = array<i32>} : memref<1x1x4x8x128xf32, #tpu.memory_space<vmem>>, vector<1x1x1x8x128xf32>,
    return
  }
  func.func @transform_0(%arg0: i32, %arg1: i32, %arg2: i32) -> (i32, i32, i32) {
    %c1_i32 = arith.constant 1 : i32
    %0 = arith.muli %arg1, %c1_i32 : i32
    %1 = arith.addi %0, %arg2 : i32
    %c0_i32 = arith.constant 0 : i32
    %2 = arith.minsi %1, %c0_i32 : i32
    %c0_i32_0 = arith.constant 0 : i32
    %c0_i32_1 = arith.constant 0 : i32
    return %arg0, %2, %c0_i32_0 : i32, i32, i32
  }
  func.func @transform_1(%arg0: i32, %arg1: i32, %arg2: i32) -> (i32, i32, i32) {
    %c1_i32 = arith.constant 1 : i32
    %0 = arith.muli %arg1, %c1_i32 : i32
    %1 = arith.addi %0, %arg2 : i32
    %c0_i32 = arith.constant 0 : i32
    %2 = arith.minsi %1, %c0_i32 : i32
    %c0_i32_0 = arith.constant 0 : i32
    %c0_i32_1 = arith.constant 0 : i32
    return %arg0, %2, %c0_i32_0 : i32, i32, i32
  }
  func.func @transform_2(%arg0: i32, %arg1: i32, %arg2: i32) -> (i32, i32, i32, i32, i32) {
    %c0_i32 = arith.constant 0 : i32
    %c0_i32_0 = arith.constant 0 : i32
    %c0_i32_1 = arith.constant 0 : i32
    %c0_i32_2 = arith.constant 0 : i32
    return %arg0, %arg1, %c0_i32, %c0_i32_0, %c0_i32_1 : i32, i32, i32, i32, i32
  }
}

</mosaic_0001>

<llo_original>
// kernel: tpu_custom_call.1
$region0: #{tpu_custom_call.1}
  #allocation0 [shape = 'u32[]', space=smem, size = 0x4, offset = 0x4, fixed_abs, tag = 'smem constant byte address 0x4 - core index']
  #allocation1 [shape = 'u32[144,128]{1,0:T(1,128)}', space=vmem, size = 0x12000, scoped, tag = 'internal scratch']
  %s0 = inlined_call_operand.hbm [shape: f32[2,8,128], index: 0, kind: input, shape index: {}]
  %s1 = inlined_call_operand.hbm [shape: f32[2,8,128], index: 1, kind: input, shape index: {}]
  %s2 = inlined_call_operand.hbm [shape: f32[2,2,4,8,128], index: 2, kind: output, shape index: {}]
  %s3 = sld [smem:[#allocation0]]
  $region53: #{tpu_custom_call.1} parent=0
    _
  %s5 = ssub.s32 1, %s3
  %s6 = scalar_select 0, %s5, %s3
  $region1: #{tpu_custom_call.1} parent=0
    #allocation2 [shape = 'u8[8192]{0}', space=vmem, size = 0x2000, scoped, tag = 'input window, operand 0']
    #allocation3 [shape = 's32[2]{0}', space=sflag, size = 0x8, scoped, tag = 'scoped memory for tpu_custom_call.1']
    #allocation4 [shape = 's32[2]{0}', space=sflag, size = 0x8, scoped, tag = 'scoped memory for tpu_custom_call.1']
    #allocation5 [shape = 'u8[8192]{0}', space=vmem, size = 0x2000, scoped, tag = 'input window, operand 1']
    #allocation6 [shape = 's32[2]{0}', space=sflag, size = 0x8, scoped, tag = 'scoped memory for tpu_custom_call.1']
    #allocation7 [shape = 'u8[32768]{0}', space=vmem, size = 0x8000, scoped, tag = 'output window, operand 0']
    %7 = vsyncpa [#allocation3], 0
    %s8 = scalar_lea.sflag [#allocation3], 1
    %9 = vsyncpa %s8, 0
    %10 = vsyncpa [#allocation6], 0
    %s11 = scalar_lea.sflag [#allocation6], 1
    %12 = vsyncpa %s11, 0
    %13 = vsyncpa [#allocation4], 0
    %s14 = scalar_lea.sflag [#allocation4], 1
    %15 = vsyncpa %s14, 0
    loop: start=0, step=1, limit=6
    $region2: #{tpu_custom_call.1} parent=1 // loop_pre_header
      _
    $region3: #{tpu_custom_call.1} parent=1 // loop_header
      %s17 = sphi 0, %s21
      %p18 = scmp.ge.s32.totalorder %s17, 6
      %s24 = sphi 0, %s43
      %s25 = sphi 0, %s39
      %s26 = sphi 0, %s35
      %s27 = sphi 0, %s24
      %s28 = sphi 0, %s25
      %s29 = sphi 0, %s26
      %s30 = sphi 0, %s27
      %s31 = sphi 0, %s28
      %s32 = sphi 0, %s29
      %s54 = sphi 0, %s56
      %s57 = sphi 0, %s54
      %s58 = sphi 0, %s57
      %s74 = sphi 0, %s58
      %s88 = sphi 0, %s90
      %s91 = sphi 0, %s88
      %s92 = sphi 0, %s91
      %s108 = sphi 0, %s92
      %s116 = sphi 0, %s118
      %s119 = sphi 0, %s116
      %s120 = sphi 0, %s119
      %s136 = sphi 0, %s120
    $region4: #{tpu_custom_call.1} parent=1 // loop_header_branch
      %20 = sbr.rel (%p18) target = $region8
    $region5: #{tpu_custom_call.1} parent=1 // loop_body
      %s22 = ssub.s32 %s17, 1
      %s23 = ssub.s32 %s17, 2
      %s33 = sadd.s32 1, %s26
      %p34 = scmp.ge.s32.totalorder %s33, 1
      %s35 = scalar_select %p34, 0, %s33
      %s36 = sadd.s32 1, %s25
      %s37 = scalar_select %p34, %s36, %s25
      %p38 = scmp.ge.s32.totalorder %s37, 2
      %s39 = scalar_select %p38, 0, %s37
      %s40 = sadd.s32 1, %s24
      %s41 = scalar_select %p38, %s40, %s24
      %p42 = scmp.ge.s32.totalorder %s41, 2
      %s43 = scalar_select %p42, 0, %s41
      %s44 = sadd.s32 %s25, %s26
      %p45 = scmp.lt.s32.totalorder %s44, 0
      %s46 = scalar_select %p45, %s44, 0
      %s47 = sadd.s32 %s39, %s35
      %p48 = scmp.lt.s32.totalorder %s47, 0
      %s49 = scalar_select %p48, %s47, 0
      %s50 = ssub.s32 %s24, %s43
      %s51 = ssub.s32 %s46, %s49
      %s52 = sor.u32 %s50, %s51
      %p53 = scmp.eq.s32.totalorder %s52, 0
      %s55 = sadd.s32 %s54, 1
      %s56 = scalar_select %p53, %s54, %s55
      %p59 = pneg %p53
      %p60 = scmp.eq.s32.totalorder %s17, 3
      %p61 = por %p59, %p60
      %p62 = scmp.ne.s32.totalorder %s54, %s57
      %p63 = scmp.eq.s32.totalorder %s17, 0
      %p64 = por %p62, %p63
      %p65 = scmp.ne.s32.totalorder %s54, %s57
      %p66 = scmp.eq.s32.totalorder %s22, 3
      %p67 = por %p65, %p66
      %p68 = scmp.ne.s32.totalorder %s57, %s58
      %p69 = scmp.eq.s32.totalorder %s22, 0
      %p70 = por %p68, %p69
      %p71 = scmp.ne.s32.totalorder %s57, %s58
      %p72 = scmp.eq.s32.totalorder %s23, 3
      %p73 = por %p71, %p72
      %p75 = scmp.ne.s32.totalorder %s58, %s74
      %p76 = scmp.eq.s32.totalorder %s23, 0
      %p77 = por %p75, %p76
      %s78 = sadd.s32 %s25, %s26
      %p79 = scmp.lt.s32.totalorder %s78, 0
      %s80 = scalar_select %p79, %s78, 0
      %s81 = sadd.s32 %s39, %s35
      %p82 = scmp.lt.s32.totalorder %s81, 0
      %s83 = scalar_select %p82, %s81, 0
      %s84 = ssub.s32 %s24, %s43
      %s85 = ssub.s32 %s80, %s83
      %s86 = sor.u32 %s84, %s85
      %p87 = scmp.eq.s32.totalorder %s86, 0
      %s89 = sadd.s32 %s88, 1
      %s90 = scalar_select %p87, %s88, %s89
      %p93 = pneg %p87
      %p94 = scmp.eq.s32.totalorder %s17, 3
      %p95 = por %p93, %p94
      %p96 = scmp.ne.s32.totalorder %s88, %s91
      %p97 = scmp.eq.s32.totalorder %s17, 0
      %p98 = por %p96, %p97
      %p99 = scmp.ne.s32.totalorder %s88, %s91
      %p100 = scmp.eq.s32.totalorder %s22, 3
      %p101 = por %p99, %p100
      %p102 = scmp.ne.s32.totalorder %s91, %s92
      %p103 = scmp.eq.s32.totalorder %s22, 0
      %p104 = por %p102, %p103
      %p105 = scmp.ne.s32.totalorder %s91, %s92
      %p106 = scmp.eq.s32.totalorder %s23, 3
      %p107 = por %p105, %p106
      %p109 = scmp.ne.s32.totalorder %s92, %s108
      %p110 = scmp.eq.s32.totalorder %s23, 0
      %p111 = por %p109, %p110
      %s112 = ssub.s32 %s24, %s43
      %s113 = ssub.s32 %s25, %s39
      %s114 = sor.u32 %s112, %s113
      %p115 = scmp.eq.s32.totalorder %s114, 0
      %s117 = sadd.s32 %s116, 1
      %s118 = scalar_select %p115, %s116, %s117
      %p121 = pneg %p115
      %p122 = scmp.eq.s32.totalorder %s17, 3
      %p123 = por %p121, %p122
      %p124 = scmp.ne.s32.totalorder %s116, %s119
      %p125 = scmp.eq.s32.totalorder %s17, 0
      %p126 = por %p124, %p125
      %p127 = scmp.ne.s32.totalorder %s116, %s119
      %p128 = scmp.eq.s32.totalorder %s22, 3
      %p129 = por %p127, %p128
      %p130 = scmp.ne.s32.totalorder %s119, %s120
      %p131 = scmp.eq.s32.totalorder %s22, 0
      %p132 = por %p130, %p131
      %p133 = scmp.ne.s32.totalorder %s119, %s120
      %p134 = scmp.eq.s32.totalorder %s23, 3
      %p135 = por %p133, %p134
      %p137 = scmp.ne.s32.totalorder %s120, %s136
      %p138 = scmp.eq.s32.totalorder %s23, 0
      %p139 = por %p137, %p138
      %p140 = scmp.le.s32.totalorder 1, %s17
      %p141 = scmp.lt.s32.totalorder %s17, 5
      %p142 = pnand %p140, %p141
      %p143 = pneg %p142
      // Predicated region
      $region9: #{tpu_custom_call.1} parent=5 // pred_check
        _
      $region10: #{tpu_custom_call.1} parent=5 // pred_check_branch
        %145 = sbr.rel (%p142) target = $region12
      $region11: #{tpu_custom_call.1} parent=5 // pred_region
        %s146 = ssub.s32 %s17, 1
      $region12: #{tpu_custom_call.1} parent=5 // pred_fallthru
        _
      %p147 = scmp.lt.s32.totalorder %s17, 4
      // Predicated region
      $region13: #{tpu_custom_call.1} parent=5 // pred_check
        %p148 = pneg %p147
      $region14: #{tpu_custom_call.1} parent=5 // pred_check_branch
        %150 = sbr.rel (%p148) target = $region16
      $region15: #{tpu_custom_call.1} parent=5 // pred_region
        // Predicated region
        $region17: #{tpu_custom_call.1} parent=15 // pred_check
          %p151 = pneg %p64
        $region18: #{tpu_custom_call.1} parent=15 // pred_check_branch
          %153 = sbr.rel (%p151) target = $region20
        $region19: #{tpu_custom_call.1} parent=15 // pred_region
          %s154 = sand.u32 %s54, 1
          %s155 = scalar_lea.sflag [#allocation3], %s154
          %s156 = sand.u32 %s54, 1
          %s157 = smul.addr %s156, 8
          %s158 = scalar_lea.vmem [#allocation2], %s157
          %s159 = sadd.s32 %s25, %s26
          %p160 = scmp.lt.s32.totalorder %s159, 0
          %s161 = scalar_select %p160, %s159, 0
          %s163 = ssub.s32 128, 128
          %164 = vsyncadd %s155, %s163
          %s165 = sadd.s32 %s161, %s24
          %s166 = smul.addr %s165, 128
          %s167 = scalar_lea.hbm %s0, %s166
          %s169 = sshll.u32 %s158, 4
          %s170 = int_to_ptr.vmem [resolvable:$true] %s169
          %172 = dma.hbm_to_vmem [thread:$0]  %s167, 128, %s170, %s155
        $region20: #{tpu_custom_call.1} parent=15 // pred_fallthru
          _
        // Predicated region
        $region21: #{tpu_custom_call.1} parent=15 // pred_check
          %p173 = pneg %p98
        $region22: #{tpu_custom_call.1} parent=15 // pred_check_branch
          %175 = sbr.rel (%p173) target = $region24
        $region23: #{tpu_custom_call.1} parent=15 // pred_region
          %s176 = sand.u32 %s88, 1
          %s177 = scalar_lea.sflag [#allocation6], %s176
          %s178 = sand.u32 %s88, 1
          %s179 = smul.addr %s178, 8
          %s180 = scalar_lea.vmem [#allocation5], %s179
          %s181 = sadd.s32 %s25, %s26
          %p182 = scmp.lt.s32.totalorder %s181, 0
          %s183 = scalar_select %p182, %s181, 0
          %s185 = ssub.s32 128, 128
          %186 = vsyncadd %s177, %s185
          %s187 = sadd.s32 %s183, %s24
          %s188 = smul.addr %s187, 128
          %s189 = scalar_lea.hbm %s1, %s188
          %s191 = sshll.u32 %s180, 4
          %s192 = int_to_ptr.vmem [resolvable:$true] %s191
          %194 = dma.hbm_to_vmem [thread:$0]  %s189, 128, %s192, %s177
        $region24: #{tpu_custom_call.1} parent=15 // pred_fallthru
          _
      $region16: #{tpu_custom_call.1} parent=5 // pred_fallthru
        _
      %p195 = scmp.le.s32.totalorder 1, %s17
      %p196 = scmp.lt.s32.totalorder %s17, 5
      %p197 = pnand %p195, %p196
      %p198 = pneg %p197
      // Predicated region
      $region25: #{tpu_custom_call.1} parent=5 // pred_check
        _
      $region26: #{tpu_custom_call.1} parent=5 // pred_check_branch
        %200 = sbr.rel (%p197) target = $region28
      $region27: #{tpu_custom_call.1} parent=5 // pred_region
        %s201 = ssub.s32 %s17, 1
        %s202 = sand.u32 %s57, 1
        %s203 = scalar_lea.sflag [#allocation3], %s202
        %s204 = sand.u32 %s57, 1
        %s205 = smul.addr %s204, 8
        %s206 = scalar_lea.vmem [#allocation2], %s205
        // Predicated region
        $region29: #{tpu_custom_call.1} parent=27 // pred_check
          %p207 = pneg %p70
        $region30: #{tpu_custom_call.1} parent=27 // pred_check_branch
          %209 = sbr.rel (%p207) target = $region32
        $region31: #{tpu_custom_call.1} parent=27 // pred_region
          %210 = dma.done %s203, 128
        $region32: #{tpu_custom_call.1} parent=27 // pred_fallthru
          _
        %s211 = sand.u32 %s91, 1
        %s212 = scalar_lea.sflag [#allocation6], %s211
        %s213 = sand.u32 %s91, 1
        %s214 = smul.addr %s213, 8
        %s215 = scalar_lea.vmem [#allocation5], %s214
        // Predicated region
        $region33: #{tpu_custom_call.1} parent=27 // pred_check
          %p216 = pneg %p104
        $region34: #{tpu_custom_call.1} parent=27 // pred_check_branch
          %218 = sbr.rel (%p216) target = $region36
        $region35: #{tpu_custom_call.1} parent=27 // pred_region
          %219 = dma.done %s212, 128
        $region36: #{tpu_custom_call.1} parent=27 // pred_fallthru
          _
        %s220 = sand.u32 %s57, 1
        %s221 = scalar_lea.sflag [#allocation3], %s220
        %s222 = sand.u32 %s57, 1
        %s223 = smul.addr %s222, 8
        %s224 = scalar_lea.vmem [#allocation2], %s223
        %p225 = pneg %p70
        %p226 = pneg %p67
        %s227 = sand.u32 %s91, 1
        %s228 = scalar_lea.sflag [#allocation6], %s227
        %s229 = sand.u32 %s91, 1
        %s230 = smul.addr %s229, 8
        %s231 = scalar_lea.vmem [#allocation5], %s230
        %p232 = pneg %p104
        %p233 = pneg %p101
        %p234 = pneg %p132
        %p235 = pneg %p129
        %s236 = sand.u32 %s119, 1
        %s237 = scalar_lea.sflag [#allocation4], %s236
        %s238 = sand.u32 %s119, 1
        %s239 = smul.addr %s238, 32
        %s240 = scalar_lea.vmem [#allocation7], %s239
        %s241 = sadd.s32 %s28, %s29
        %p242 = scmp.lt.s32.totalorder %s241, 0
        %s243 = scalar_select %p242, %s241, 0
        %s244 = sadd.s32 %s28, %s29
        %p245 = scmp.lt.s32.totalorder %s244, 0
        %s246 = scalar_select %p245, %s244, 0
        %p247 = scmp.eq.s32.totalorder %s29, 0
        // Predicated region
        $region37: #{tpu_custom_call.1} parent=27 // pred_check
          %p248 = pneg %p247
        $region38: #{tpu_custom_call.1} parent=27 // pred_check_branch
          %250 = sbr.rel (%p248) target = $region40
        $region39: #{tpu_custom_call.1} parent=27 // pred_region
          %251 = vst [vmem:[%s240] sm:$0xff] 0.0
          %252 = vst [vmem:[%s240 + $0x8] sm:$0xff] 0.0
          %253 = vst [vmem:[%s240 + $0x10] sm:$0xff] 0.0
          %254 = vst [vmem:[%s240 + $0x18] sm:$0xff] 0.0
        $region40: #{tpu_custom_call.1} parent=27 // pred_fallthru
          _
        %s255 = sadd.s32 %s28, %s29
        %s256 = smul.u32 %s255, 8
        %v257 = vld [vmem:[%s206] sm:$0xff]
        %v258 = vld [vmem:[%s215] sm:$0xff]
        %s259 = ssub.s32 8, %s256
        %v260 = vlaneseq
        %v261 = vshrl.u32 %v260, 7
        %v262 = vstv %s259
        %vm263 = vcmp.lt.s32.totalorder %v261, %v262
        %v264 = vsel %vm263, 1, 0
        %vm265 = vcmp.eq.s32.totalorder %v264, 1
        %v266 = vsel %vm265, %v257, 0.0
        %v267 = vsel %vm265, %v258, 0.0
        %v268 = vlog2.pop %v266
        %v269 = vmul.f32 %v268, 0.6931472
        %v270 = vmax.f32 %v269, -100.0
        %v271 = vsub.f32 1.0, %v266
        %v272 = vlog2.pop %v271
        %v273 = vmul.f32 %v272, 0.6931472
        %v274 = vmax.f32 %v273, -100.0
        %v275 = vsub.f32 %v270, %v274
        %v276 = vmul.f32 %v267, %v275
        %v277 = vadd.f32 %v274, %v276
        %v278 = vsub.f32 0.0, %v277
        %v279 = vadd.f32 %v278, 0.0
        %v280 = vadd.f32 %v279, 0.0
        %v281 = vmul.f32 %v266, %v267
        %v282 = vadd.f32 %v281, 0.0
        %v283 = vadd.f32 %v282, 0.0
        %v284 = vadd.f32 %v266, 0.0
        %v285 = vadd.f32 %v284, 0.0
        %v286 = vadd.f32 %v267, 0.0
        %v287 = vadd.f32 %v286, 0.0
        %v288 = vld [vmem:[%s240] sm:$0xff]
        %v289 = vadd.f32 %v288, %v280
        %290 = vst [vmem:[%s240] sm:$0xff] %v289
        %s291 = scalar_lea.vmem %s240, 8 [#allocation7]
        %v292 = vld [vmem:[%s291] sm:$0xff]
        %v293 = vadd.f32 %v292, %v283
        %294 = vst [vmem:[%s291] sm:$0xff] %v293
        %s295 = scalar_lea.vmem %s240, 16 [#allocation7]
        %v296 = vld [vmem:[%s295] sm:$0xff]
        %v297 = vadd.f32 %v296, %v285
        %298 = vst [vmem:[%s295] sm:$0xff] %v297
        %s299 = scalar_lea.vmem %s240, 24 [#allocation7]
        %v300 = vld [vmem:[%s299] sm:$0xff]
        %v301 = vadd.f32 %v300, %v287
        %302 = vst [vmem:[%s299] sm:$0xff] %v301
        %s303 = sand.u32 %s119, 1
        %s304 = scalar_lea.sflag [#allocation4], %s303
        %s305 = sand.u32 %s119, 1
        %s306 = smul.addr %s305, 32
        %s307 = scalar_lea.vmem [#allocation7], %s306
        // Predicated region
        $region41: #{tpu_custom_call.1} parent=27 // pred_check
          %p308 = pneg %p129
        $region42: #{tpu_custom_call.1} parent=27 // pred_check_branch
          %310 = sbr.rel (%p308) target = $region44
        $region43: #{tpu_custom_call.1} parent=27 // pred_region
          %s312 = ssub.s32 512, 512
          %313 = vsyncadd %s304, %s312
          %s314 = smul.addr %s28, 4
          %s315 = smul.addr %s27, 8
          %s316 = sadd.s32 %s314, %s315
          %s317 = smul.addr %s316, 128
          %s318 = scalar_lea.hbm %s2, %s317
          %s319 = sshll.u32 %s307, 4
          %s320 = int_to_ptr.vmem [resolvable:$true] %s319
          %325 = dma.vmem_to_hbm [thread:$0]  %s320, 512, %s318, %s304, 128, 128, 8
        $region44: #{tpu_custom_call.1} parent=27 // pred_fallthru
          _
      $region28: #{tpu_custom_call.1} parent=5 // pred_fallthru
        _
      %p326 = scmp.le.s32.totalorder 2, %s17
      // Predicated region
      $region45: #{tpu_custom_call.1} parent=5 // pred_check
        %p327 = pneg %p326
      $region46: #{tpu_custom_call.1} parent=5 // pred_check_branch
        %329 = sbr.rel (%p327) target = $region48
      $region47: #{tpu_custom_call.1} parent=5 // pred_region
        %s330 = ssub.s32 %s17, 2
        // Predicated region
        $region49: #{tpu_custom_call.1} parent=47 // pred_check
          %p331 = pneg %p135
        $region50: #{tpu_custom_call.1} parent=47 // pred_check_branch
          %333 = sbr.rel (%p331) target = $region52
        $region51: #{tpu_custom_call.1} parent=47 // pred_region
          %s334 = sand.u32 %s120, 1
          %s335 = scalar_lea.sflag [#allocation4], %s334
          %s336 = sand.u32 %s120, 1
          %s337 = smul.addr %s336, 32
          %s338 = scalar_lea.vmem [#allocation7], %s337
          %339 = dma.done %s335, 512
        $region52: #{tpu_custom_call.1} parent=47 // pred_fallthru
          _
      $region48: #{tpu_custom_call.1} parent=5 // pred_fallthru
        _
    $region6: #{tpu_custom_call.1} parent=1 // loop_footer
      %s21 = sadd.s32 1, %s17
    $region7: #{tpu_custom_call.1} parent=1 // loop_footer_branch
      %16 = sbr.rel target = $region3
    $region8: #{tpu_custom_call.1} parent=1 // loop_exit
      _
    %340 = vsyncpa [#allocation3], 1
    %s341 = scalar_lea.sflag [#allocation3], 1
    %342 = vsyncpa %s341, 1
    %343 = vsyncpa [#allocation6], 1
    %s344 = scalar_lea.sflag [#allocation6], 1
    %345 = vsyncpa %s344, 1
    %346 = vsyncpa [#allocation4], 1
    %s347 = scalar_lea.sflag [#allocation4], 1
    %348 = vsyncpa %s347, 1

</llo_original>
